<compile_context>
chip_gen: v5e
topology: v5e:2x2
jax: 0.10.0
libtpu: 0.0.40
codegen_flags: <defaults>
</compile_context>

<pallas_src>
import functools

import jax
import jax.numpy as jnp
from jax.experimental import pallas as pl
from jax.experimental.pallas import tpu as pltpu

EPS = 1e-6  # matches torch.nn.functional.pairwise_distance default eps


def _contrastive_loss_kernel(x1_ref, x2_ref, label_ref, out_ref,
                             *, batch_size, margin, needs_mask):
    i = pl.program_id(0)
    tb = x1_ref.shape[0]

    x1 = x1_ref[...].astype(jnp.float32)          # (TB, D)
    x2 = x2_ref[...].astype(jnp.float32)          # (TB, D)
    label = label_ref[...].astype(jnp.float32)    # (TB, 1)

    diff = x1 - x2 + EPS                          # pairwise_distance adds eps to diff
    d2 = jnp.sum(diff * diff, axis=-1, keepdims=True)   # (TB, 1) squared distance
    d = jnp.sqrt(d2)                                     # (TB, 1) Euclidean distance

    hinge = jnp.maximum(margin - d, 0.0)
    # Reuse d2 for the similar-pair term (no redundant d*d).
    loss = (1.0 - label) * d2 + label * (hinge * hinge)  # (TB, 1)

    def _emit(total):
        # Lane-dense, unmasked (8,128) store of this tile's partial sum.
        out_ref[...] = jnp.full(out_ref.shape, total, dtype=jnp.float32)

    if needs_mask:
        # Only the last tile has padded rows; keep all other steps free of the
        # narrow (TB,1) iota/compare/select work.
        is_last = i == pl.num_programs(0) - 1

        @pl.when(is_last)
        def _():
            row_ids = i * tb + jax.lax.broadcasted_iota(jnp.int32, (tb, 1), 0)
            masked = jnp.where(row_ids < batch_size, loss, 0.0)
            _emit(jnp.sum(masked))

        @pl.when(jnp.logical_not(is_last))
        def _():
            _emit(jnp.sum(loss))
    else:
        _emit(jnp.sum(loss))


def _vmem_budget():
    """Per-generation (per-input tile bytes, vmem_limit_bytes)."""
    try:
        cap = int(pltpu.get_tpu_info().vmem_capacity_bytes)
    except Exception:
        cap = 64 << 20  # conservative fallback: assume v7x-sized VMEM
    if cap >= (96 << 20):          # v5e / v6e: 128 MiB physical VMEM
        return 12 << 20, 64 << 20
    else:                          # v7x: 64 MiB physical (32 MiB scoped default)
        return 5 << 20, 40 << 20


def _choose_row_tile(batch, feat, itemsize, max_tile_bytes):
    """Row tile sized by bytes only: multiple of 8, no row-count cap."""
    row_bytes = max(feat * itemsize, 1)
    if batch * row_bytes <= max_tile_bytes:
        return batch  # single tile; block == full dim so any B is legal
    rows = (max_tile_bytes // row_bytes) // 8 * 8
    return int(max(8, rows))


def contrastive_loss(output1, output2, label, margin=1.0, row_tile=None):
    B, D = output1.shape
    assert output2.shape == (B, D)
    assert label.shape == (B, 1)

    max_tile_bytes, vmem_limit = _vmem_budget()
    itemsize = jnp.dtype(output1.dtype).itemsize
    tb = row_tile if row_tile is not None else _choose_row_tile(
        B, D, itemsize, max_tile_bytes)
    num_tiles = pl.cdiv(B, tb)
    needs_mask = (B % tb) != 0

    kernel = functools.partial(
        _contrastive_loss_kernel,
        batch_size=B, margin=float(margin), needs_mask=needs_mask)

    partials = pl.pallas_call(
        kernel,
        out_shape=jax.ShapeDtypeStruct((num_tiles, 8, 128), jnp.float32),
        grid_spec=pltpu.PrefetchScalarGridSpec(
            num_scalar_prefetch=0,
            grid=(num_tiles,),
            in_specs=[
                pl.BlockSpec((tb, D), lambda i: (i, 0)),
                pl.BlockSpec((tb, D), lambda i: (i, 0)),
                pl.BlockSpec((tb, 1), lambda i: (i, 0)),
            ],
            out_specs=pl.BlockSpec((1, 8, 128), lambda i: (i, 0, 0)),
        ),
        compiler_params=pltpu.CompilerParams(
            dimension_semantics=("parallel",),   # independent per-tile partials
            vmem_limit_bytes=vmem_limit,
        ),
    )(output1, output2, label)

    # Final f32 reduction of per-tile partial sums, then the mean.
    return jnp.sum(partials[:, 0, 0]) / jnp.float32(B)


def contrastive_loss_ref(output1, output2, label, margin=1.0):
    # Pure-JAX reference mirroring the PyTorch module.
    diff = output1.astype(jnp.float32) - output2.astype(jnp.float32) + EPS
    d = jnp.sqrt(jnp.sum(diff * diff, axis=-1, keepdims=True))
    loss = (1.0 - label) * d**2 + label * jnp.maximum(margin - d, 0.0) ** 2
    return jnp.mean(loss)


if __name__ == "__main__":
    key = jax.random.PRNGKey(0)
    k1, k2, k3 = jax.random.split(key, 3)

    # Primary check: small shapes consistent with the module's forward.
    B, D = 8, 32
    output1 = jax.random.normal(k1, (B, D), dtype=jnp.float32)
    output2 = jax.random.normal(k2, (B, D), dtype=jnp.float32)
    label = jax.random.bernoulli(k3, p=0.5, shape=(B, 1)).astype(jnp.float32)

    loss = contrastive_loss(output1, output2, label)
    jax.block_until_ready(loss)
    ref = contrastive_loss_ref(output1, output2, label)
    assert jnp.allclose(loss, ref, atol=1e-5, rtol=1e-5), (loss, ref)

    # Second check: B not a multiple of the row tile -> exercises the
    # multi-tile parallel grid, per-tile partials, and last-tile masking.
    B2 = 10
    o1 = jax.random.normal(k1, (B2, D), dtype=jnp.float32)
    o2 = jax.random.normal(k2, (B2, D), dtype=jnp.float32)
    lb = jax.random.bernoulli(k3, p=0.5, shape=(B2, 1)).astype(jnp.float32)

    loss2 = contrastive_loss(o1, o2, lb, row_tile=8)
    jax.block_until_ready(loss2)
    ref2 = contrastive_loss_ref(o1, o2, lb)
    assert jnp.allclose(loss2, ref2, atol=1e-5, rtol=1e-5), (loss2, ref2)

    # Third check: bf16 passthrough inputs (halved HBM traffic path).
    o1b = output1.astype(jnp.bfloat16)
    o2b = output2.astype(jnp.bfloat16)
    loss3 = contrastive_loss(o1b, o2b, label)
    jax.block_until_ready(loss3)
    ref3 = contrastive_loss_ref(o1b, o2b, label)
    assert jnp.allclose(loss3, ref3, atol=1e-2, rtol=1e-2), (loss3, ref3)

    print("KERNEL_OK")
</pallas_src>

<mosaic_0001>
module attributes {stable_mosaic.version = 11 : i64} {
  func.func @_contrastive_loss_kernel(%arg0: i32, %arg1: memref<8x32xf32, #tpu.memory_space<vmem>>, %arg2: memref<8x32xf32, #tpu.memory_space<vmem>>, %arg3: memref<8x1xf32, #tpu.memory_space<vmem>>, %arg4: memref<1x8x128xf32, #tpu.memory_space<vmem>>) attributes {dimension_semantics = [#tpu.dimension_semantics<parallel>], iteration_bounds = array<i64: 1>, scalar_prefetch = 0 : i64, scratch_operands = 0 : i64, tpu.core_type = #tpu.core_type<tc>, window_params = [{transform_indices = @transform_0, window_bounds = array<i64: 8, 32>}, {transform_indices = @transform_1, window_bounds = array<i64: 8, 32>}, {transform_indices = @transform_2, window_bounds = array<i64: 8, 1>}, {transform_indices = @transform_3, window_bounds = array<i64: 1, 8, 128>}]} {
    %c0 = arith.constant 0 : index
    %c0_0 = arith.constant 0 : index
    %0 = vector.load %arg1[%c0, %c0_0] : memref<8x32xf32, #tpu.memory_space<vmem>>, vector<8x32xf32>
    %c0_1 = arith.constant 0 : index
    %c0_2 = arith.constant 0 : index
    %1 = vector.load %arg2[%c0_1, %c0_2] : memref<8x32xf32, #tpu.memory_space<vmem>>, vector<8x32xf32>
    %c0_3 = arith.constant 0 : index
    %c0_4 = arith.constant 0 : index
    %2 = vector.load %arg3[%c0_3, %c0_4] : memref<8x1xf32, #tpu.memory_space<vmem>>, vector<8x1xf32>
    %3 = arith.subf %0, %1 : vector<8x32xf32>
    %cst = arith.constant 9.99999997E-7 : f32
    %4 = vector.broadcast %cst : f32 to vector<8x32xf32>
    %5 = arith.addf %3, %4 : vector<8x32xf32>
    %6 = arith.mulf %5, %5 : vector<8x32xf32>
    %cst_5 = arith.constant dense<0.000000e+00> : vector<8xf32>
    %7 = vector.multi_reduction <add>, %6, %cst_5 [1] : vector<8x32xf32> to vector<8xf32>
    %8 = vector.shape_cast %7 : vector<8xf32> to vector<8x1xf32>
    %9 = math.sqrt %8 : vector<8x1xf32>
    %cst_6 = arith.constant 1.000000e+00 : f32
    %10 = vector.broadcast %cst_6 : f32 to vector<8x1xf32>
    %11 = arith.subf %10, %9 : vector<8x1xf32>
    %cst_7 = arith.constant 0.000000e+00 : f32
    %12 = vector.broadcast %cst_7 : f32 to vector<8x1xf32>
    %13 = arith.maximumf %11, %12 : vector<8x1xf32>
    %cst_8 = arith.constant 1.000000e+00 : f32
    %14 = vector.broadcast %cst_8 : f32 to vector<8x1xf32>
    %15 = arith.subf %14, %2 : vector<8x1xf32>
    %16 = arith.mulf %15, %8 : vector<8x1xf32>
    %17 = arith.mulf %13, %13 : vector<8x1xf32>
    %18 = arith.mulf %2, %17 : vector<8x1xf32>
    %19 = arith.addf %16, %18 : vector<8x1xf32>
    %20 = vector.shape_cast %19 : vector<8x1xf32> to vector<1x8x1xf32>
    %cst_9 = arith.constant dense<0.000000e+00> : vector<1xf32>
    %21 = vector.multi_reduction <add>, %20, %cst_9 [1, 2] : vector<1x8x1xf32> to vector<1xf32>
    %22 = vector.shape_cast %21 : vector<1xf32> to vector<1x1x1xf32>
    %23 = vector.extract %22[0, 0, 0] : f32 from vector<1x1x1xf32>
    %24 = vector.broadcast %23 : f32 to vector<1x8x128xf32>
    %c0_10 = arith.constant 0 : index
    %c0_11 = arith.constant 0 : index
    %c0_12 = arith.constant 0 : index
    %25 = vector.load %arg4[%c0_10, %c0_11, %c0_12] : memref<1x8x128xf32, #tpu.memory_space<vmem>>, vector<1x8x128xf32>
    tpu.vector_store %arg4[%c0_10, %c0_11, %c0_12], %24 {strides = array<i32>} : memref<1x8x128xf32, #tpu.memory_space<vmem>>, vector<1x8x128xf32>,
    return
  }
  func.func @transform_0(%arg0: i32) -> (i32, i32) {
    %c0_i32 = arith.constant 0 : i32
    %c0_i32_0 = arith.constant 0 : i32
    return %arg0, %c0_i32 : i32, i32
  }
  func.func @transform_1(%arg0: i32) -> (i32, i32) {
    %c0_i32 = arith.constant 0 : i32
    %c0_i32_0 = arith.constant 0 : i32
    return %arg0, %c0_i32 : i32, i32
  }
  func.func @transform_2(%arg0: i32) -> (i32, i32) {
    %c0_i32 = arith.constant 0 : i32
    %c0_i32_0 = arith.constant 0 : i32
    return %arg0, %c0_i32 : i32, i32
  }
  func.func @transform_3(%arg0: i32) -> (i32, i32, i32) {
    %c0_i32 = arith.constant 0 : i32
    %c0_i32_0 = arith.constant 0 : i32
    %c0_i32_1 = arith.constant 0 : i32
    return %arg0, %c0_i32, %c0_i32_0 : i32, i32, i32
  }
}

</mosaic_0001>

<llo_original>
// kernel: tpu_custom_call.1
$region0: #{tpu_custom_call.1}
  #allocation0 [shape = 'u32[]', space=smem, size = 0x4, offset = 0x4, fixed_abs, tag = 'smem constant byte address 0x4 - core index']
  #allocation1 [shape = 'u32[72,128]{1,0:T(1,128)}', space=vmem, size = 0x9000, scoped, tag = 'internal scratch']
  %s0 = inlined_call_operand.vmem [shape: f32[8,32], index: 0, kind: input, shape index: {}]
  %s1 = inlined_call_operand.hbm [shape: f32[8,32], index: 1, kind: input, shape index: {}]
  %s2 = inlined_call_operand.vmem [shape: f32[8,1], index: 2, kind: input, shape index: {}]
  %s3 = inlined_call_operand.hbm [shape: f32[1,8,128], index: 3, kind: output, shape index: {}]
  %s4 = sld [smem:[#allocation0]]
  $region26: #{tpu_custom_call.1} parent=0
    _
  %s6 = ssub.s32 1, %s4
  %s7 = scalar_select 0, %s6, %s4
  $region1: #{tpu_custom_call.1} parent=0
    #allocation2 [shape = 'u8[4096]{0}', space=vmem, size = 0x1000, scoped, tag = 'input window, operand 1, single buffered']
    #allocation3 [shape = 's32[1]{0}', space=sflag, size = 0x4, scoped, tag = 'scoped memory for tpu_custom_call.1']
    #allocation4 [shape = 's32[1]{0}', space=sflag, size = 0x4, scoped, tag = 'scoped memory for tpu_custom_call.1']
    #allocation5 [shape = 'u8[4096]{0}', space=vmem, size = 0x1000, scoped, tag = 'output window, operand 0, single buffered']
    %8 = vsyncpa [#allocation3], 0
    %9 = vsyncpa [#allocation4], 0
    // Predicated region
    $region2: #{tpu_custom_call.1} parent=1 // pred_check
      _
    $region3: #{tpu_custom_call.1} parent=1 // pred_check_branch
      %11 = sbr.rel (0) target = $region5
    $region4: #{tpu_custom_call.1} parent=1 // pred_region
      _
    $region5: #{tpu_custom_call.1} parent=1 // pred_fallthru
      _
    // Predicated region
    $region6: #{tpu_custom_call.1} parent=1 // pred_check
      _
    $region7: #{tpu_custom_call.1} parent=1 // pred_check_branch
      %13 = sbr.rel (0) target = $region9
    $region8: #{tpu_custom_call.1} parent=1 // pred_region
      %15 = vsyncadd [#allocation3], 0
      %s17 = sshll.u32 %s1, 4
      %s18 = int_to_ptr.hbm [resolvable:$true] %s17
      %s19 = sshll.u32 [#allocation2], 4
      %s20 = int_to_ptr.vmem [resolvable:$true] %s19
      %22 = dma.hbm_to_vmem [thread:$0]  %s18, 128, %s20, [#allocation3]
    $region9: #{tpu_custom_call.1} parent=1 // pred_fallthru
      _
    // Predicated region
    $region10: #{tpu_custom_call.1} parent=1 // pred_check
      _
    $region11: #{tpu_custom_call.1} parent=1 // pred_check_branch
      %24 = sbr.rel (0) target = $region13
    $region12: #{tpu_custom_call.1} parent=1 // pred_region
      _
    $region13: #{tpu_custom_call.1} parent=1 // pred_fallthru
      _
    // Predicated region
    $region14: #{tpu_custom_call.1} parent=1 // pred_check
      _
    $region15: #{tpu_custom_call.1} parent=1 // pred_check_branch
      %26 = sbr.rel (0) target = $region17
    $region16: #{tpu_custom_call.1} parent=1 // pred_region
      %28 = dma.done [#allocation3], 128
    $region17: #{tpu_custom_call.1} parent=1 // pred_fallthru
      _
    %v29 = vld [vmem:[%s0] sm:$0xff]
    %v30 = vld [vmem:[#allocation2] sm:$0xff]
    %v31 = vld [vmem:[%s2] sm:$0xff]
    %v32 = vsub.f32 %v29, %v30
    %v33 = vadd.f32 %v32, 1e-06
    %v34 = vmul.f32 %v33, %v33
    %vm35 = vcmask 261120
    %v36 = vsel %vm35, %v34, 0.0
    %37 = vadd.xlane.f32.xlu0 %v36
    %v38 = vpop.xlane.xlu0 %37
    %v39 = vrsqrt.pop %v38
    %v40 = vmul.f32 %v39, %v38
    %v41 = vmul.f32 %v40, %v39
    %v42 = vmul.f32 0.5, %v41
    %v43 = vsub.f32 1.5, %v42
    %v44 = vmul.f32 %v39, %v43
    %v45 = vmul.f32 %v38, %v44
    %vm46 = vcmp.eq.f32.partialorder %v38, inf
    %v47 = vsel %vm46, %v38, %v45
    %vm48 = vcmp.eq.f32.partialorder %v38, 0.0
    %v49 = vand.u32 %v38, 2147483648
    %v50 = vsel %vm48, %v49, %v47
    %v51 = vsub.f32 1.0, %v50
    %v52 = vmax.f32 %v51, 0.0
    %v53 = vsub.f32 1.0, %v31
    %v54 = vmul.f32 %v53, %v38
    %v55 = vmul.f32 %v52, %v52
    %v56 = vmul.f32 %v31, %v55
    %v57 = vadd.f32 %v54, %v56
    %vm58 = vcmask 7168
    %v59 = vsel %vm58, %v57, 0.0
    %60 = vadd.xlane.f32.xlu0 %v59
    %v61 = vpop.xlane.xlu0 %60
    %v62 = vrot.slane %v61, 4
    %v63 = vadd.f32 %v61, %v62
    %v64 = vrot.slane %v63, 2
    %v65 = vadd.f32 %v63, %v64
    %v66 = vrot.slane %v65, 1
    %v67 = vadd.f32 %v65, %v66
    %s68 = vtos %v67
    %v69 = vstv %s68
    %70 = vst [vmem:[#allocation5] sm:$0xff] %v69
    // Predicated region
    $region18: #{tpu_custom_call.1} parent=1 // pred_check
      _
    $region19: #{tpu_custom_call.1} parent=1 // pred_check_branch
      %72 = sbr.rel (0) target = $region21
    $region20: #{tpu_custom_call.1} parent=1 // pred_region
      %74 = vsyncadd [#allocation4], 0
      %s76 = sshll.u32 [#allocation5], 4
      %s77 = int_to_ptr.vmem [resolvable:$true] %s76
      %s78 = sshll.u32 %s3, 4
      %s79 = int_to_ptr.hbm [resolvable:$true] %s78
      %81 = dma.vmem_to_hbm [thread:$0]  %s77, 128, %s79, [#allocation4]
    $region21: #{tpu_custom_call.1} parent=1 // pred_fallthru
      _
    // Predicated region
    $region22: #{tpu_custom_call.1} parent=1 // pred_check
      _
    $region23: #{tpu_custom_call.1} parent=1 // pred_check_branch
      %83 = sbr.rel (0) target = $region25
    $region24: #{tpu_custom_call.1} parent=1 // pred_region
      %85 = dma.done [#allocation4], 128
    $region25: #{tpu_custom_call.1} parent=1 // pred_fallthru
      _
    %86 = vsyncpa [#allocation3], 1
    %87 = vsyncpa [#allocation4], 1

</llo_original>
